<compile_context>
chip_gen: v6e
topology: v6e:2x2x1
jax: 0.10.0
libtpu: 0.0.40
codegen_flags: <defaults>
</compile_context>

<pallas_src>
import math

import jax
import jax.numpy as jnp
from jax import lax
from jax.experimental import pallas as pl
from jax.experimental.pallas import tpu as pltpu

EMB = 64          # emb_dim in the reference module
X_DIM = 2 * EMB   # node feature width (128)


def _round_up(a, b):
    return ((a + b - 1) // b) * b


def _clamp_tile(requested, extent, align):
    """Align the requested tile, cap it to the (padded) extent, and keep at
    least 2 blocks on the axis when possible so both v7x TensorCores get work
    when the axis is marked 'parallel'."""
    ext = _round_up(max(extent, 1), align)
    t = _round_up(min(requested, ext), align)
    if ext // t < 2 and t > align:
        t = _round_up(max(align, ext // 2), align)
    return t


# ---------------------------------------------------------------------------
# Pass 1: per-edge MLP (node_mlp_1).  Grid: (edge tiles,)  [parallel]
# ---------------------------------------------------------------------------
def edge_mlp_kernel(x_send_ref, e_attr_ref,
                    w1x_ref, w1e_ref, b1_ref, w12_ref, b12_ref,
                    h_ref):
    # Linear(3*EMB -> EMB): cat([x_send, edge_attr]) @ W == x_send@Wx + e@We
    h = (jnp.dot(x_send_ref[...], w1x_ref[...], preferred_element_type=jnp.float32)
         + jnp.dot(e_attr_ref[...], w1e_ref[...], preferred_element_type=jnp.float32)
         + b1_ref[...])
    h = jnp.maximum(h, 0.0)                                   # ReLU in f32 (VPU)
    # Linear(EMB -> EMB) + ReLU
    h = (jnp.dot(h.astype(jnp.bfloat16), w12_ref[...],
                 preferred_element_type=jnp.float32) + b12_ref[...])
    h_ref[...] = jnp.maximum(h, 0.0).astype(h_ref.dtype)      # bf16 edge features


# ---------------------------------------------------------------------------
# Pass 2: scatter_add + per-node MLP (node_mlp_2).
# Grid: (node tiles [parallel], edge tiles [arbitrary reduction])
# ---------------------------------------------------------------------------
def make_scatter_node_kernel(tile_e, h_resident):
    """Kernel factory.  When h_resident, h/recv refs hold the FULL padded edge
    arrays (VMEM-resident across all grid steps) and are sliced in-kernel;
    otherwise they hold one (tile_e, ...) block streamed from HBM per step."""

    def kernel(x_ref, h_ref, recv_ref,
               w2x_ref, w2a_ref, b2_ref, w22_ref, b22_ref,
               out_ref, agg_ref):
        j = pl.program_id(1)
        tile_n = agg_ref.shape[0]

        @pl.when(j == 0)
        def _init():
            agg_ref[...] = jnp.zeros_like(agg_ref)

        if h_resident:
            off = pl.multiple_of(j * tile_e, tile_e)
            h_blk = h_ref[pl.ds(off, tile_e), :]
            recv_blk = recv_ref[:, pl.ds(off, tile_e)]
        else:
            h_blk = h_ref[...]
            recv_blk = recv_ref[...]

        # scatter_add restricted to this (node tile, edge tile) block as a
        # one-hot bf16 matmul on the MXU.  VALU trim: subtract the scalar
        # node_base from the (1, tile_e) receiver row once, then compare
        # against a plain tile-local iota (no full-tile integer add).
        # Padded edges carry receiver == n_pad, so recv_local >= tile_n for
        # every node tile and they never match.
        node_base = pl.program_id(0) * tile_n
        recv_local = recv_blk - node_base                       # (1, tile_e)
        row_ids = lax.broadcasted_iota(jnp.int32, (tile_n, tile_e), 0)
        seg = (row_ids == recv_local).astype(jnp.bfloat16)      # [tile_n, tile_e]
        agg_ref[...] += jnp.dot(seg, h_blk, preferred_element_type=jnp.float32)

        @pl.when(j == pl.num_programs(1) - 1)
        def _finalize():
            # Linear(3*EMB -> EMB) via split weights + ReLU
            g = (jnp.dot(x_ref[...], w2x_ref[...], preferred_element_type=jnp.float32)
                 + jnp.dot(agg_ref[...].astype(jnp.bfloat16), w2a_ref[...],
                           preferred_element_type=jnp.float32)
                 + b2_ref[...])
            g = jnp.maximum(g, 0.0)
            # Linear(EMB -> EMB) + ReLU
            g = (jnp.dot(g.astype(jnp.bfloat16), w22_ref[...],
                         preferred_element_type=jnp.float32) + b22_ref[...])
            out_ref[...] = jnp.maximum(g, 0.0).astype(out_ref.dtype)

    return kernel


# ---------------------------------------------------------------------------
# Wrapper: padding, sentinel receivers, glue gather, two pallas_calls.
# ---------------------------------------------------------------------------
def node_model_forward(x, edge_index, edge_attr, params, *,
                       tile_n=1024, tile_e_mlp=4096, tile_e_scatter=1024,
                       h_resident=None, out_dtype=jnp.float32):
    n = x.shape[0]
    e = edge_attr.shape[0]

    # Tile sizes: (8,128)-aligned (16 rows for bf16 packing), clamped to the
    # problem size, kept at >= 2 blocks on parallel axes when possible.
    tile_n = _clamp_tile(tile_n, n, 16)
    tile_e1 = _clamp_tile(tile_e_mlp, e, 128)       # pass 1 edge tile
    tile_e2 = _clamp_tile(tile_e_scatter, e, 128)   # pass 2 edge tile
    n_pad = _round_up(n, tile_n)
    e_pad = _round_up(e, math.lcm(tile_e1, tile_e2))
    n_node_tiles = n_pad // tile_n
    e_tiles1 = e_pad // tile_e1
    e_tiles2 = e_pad // tile_e2

    # Keep h (+ receiver row) fully VMEM-resident in pass 2 when it fits a
    # conservative budget (safe under v7x's 64 MiB after seg temporaries,
    # double-buffered x blocks, and the f32 accumulator/output).
    if h_resident is None:
        h_resident = (e_pad * EMB * 2 + e_pad * 4) <= 12 * 1024 * 1024

    bf = jnp.bfloat16
    x_b = jnp.pad(x, ((0, n_pad - n), (0, 0))).astype(bf)             # [n_pad, 128]
    e_b = jnp.pad(edge_attr, ((0, e_pad - e), (0, 0))).astype(bf)     # [e_pad, 64]
    senders = jnp.pad(edge_index[0].astype(jnp.int32), (0, e_pad - e))
    receivers = jnp.pad(edge_index[1].astype(jnp.int32), (0, e_pad - e),
                        constant_values=n_pad)                        # sentinel
    # TODO(synk): move this sender gather in-kernel (VMEM-resident x + scalar
    # prefetched indices / DMA gather) to avoid materializing the [E, 2*EMB]
    # stream through HBM for very large E.
    x_send = jnp.take(x_b, senders, axis=0)                           # [e_pad, 128] bf16
    recv_2d = receivers.reshape(1, e_pad)

    w1x = params["w1x"].astype(bf)
    w1e = params["w1e"].astype(bf)
    w12 = params["w12"].astype(bf)
    w2x = params["w2x"].astype(bf)
    w2a = params["w2a"].astype(bf)
    w22 = params["w22"].astype(bf)
    b1, b12, b2, b22 = params["b1"], params["b12"], params["b2"], params["b22"]

    const = lambda *_: (0, 0)   # weights/biases stay VMEM-resident across steps

    # ---- pass 1: per-edge MLP (each edge computed exactly once) ----
    # Footprint per step ~ tile_e1 * 256 cols * 2 B ~= 2 MiB at tile_e1=4096;
    # double-buffered it stays well inside 32 MiB on every generation.
    flops1 = 2 * e_pad * (X_DIM + 2 * EMB) * EMB
    bytes1 = (2 * e_pad * (X_DIM + 2 * EMB)            # x_send + edge_attr + h (bf16)
              + 2 * (X_DIM + 2 * EMB) * EMB            # weights (bf16)
              + 4 * 2 * EMB)                           # biases (f32)
    h = pl.pallas_call(
        edge_mlp_kernel,
        out_shape=jax.ShapeDtypeStruct((e_pad, EMB), bf),
        grid_spec=pltpu.PrefetchScalarGridSpec(
            num_scalar_prefetch=0,
            grid=(e_tiles1,),
            in_specs=[
                pl.BlockSpec((tile_e1, X_DIM), lambda j: (j, 0)),   # x[senders]
                pl.BlockSpec((tile_e1, EMB), lambda j: (j, 0)),     # edge_attr
                pl.BlockSpec((X_DIM, EMB), const),                  # w1x
                pl.BlockSpec((EMB, EMB), const),                    # w1e
                pl.BlockSpec((1, EMB), const),                      # b1
                pl.BlockSpec((EMB, EMB), const),                    # w12
                pl.BlockSpec((1, EMB), const),                      # b12
            ],
            out_specs=pl.BlockSpec((tile_e1, EMB), lambda j: (j, 0)),
        ),
        compiler_params=pltpu.CompilerParams(
            dimension_semantics=("parallel",),
            vmem_limit_bytes=32 * 1024 * 1024),
        cost_estimate=pl.CostEstimate(flops=flops1, transcendentals=0,
                                      bytes_accessed=bytes1),
    )(x_send, e_b, w1x, w1e, b1, w12, b12)

    # ---- pass 2: tiled scatter_add + per-node MLP ----
    # TODO(synk): for very large N/E, replace the dense per-node-tile one-hot
    # matmul with an edge-sorted segment sum using scalar-prefetched offsets
    # (MoE grouped-matmul pattern); the dense form scales as O(N*E*EMB).
    if h_resident:
        h_spec = pl.BlockSpec((e_pad, EMB), lambda i, j: (0, 0))     # whole array, resident
        recv_spec = pl.BlockSpec((1, e_pad), lambda i, j: (0, 0))
    else:
        h_spec = pl.BlockSpec((tile_e2, EMB), lambda i, j: (j, 0))   # streamed per edge tile
        recv_spec = pl.BlockSpec((1, tile_e2), lambda i, j: (0, j))

    out_itemsize = jnp.dtype(out_dtype).itemsize
    h_vmem = (e_pad * EMB * 2 + e_pad * 4) if h_resident \
        else 2 * (tile_e2 * EMB * 2 + tile_e2 * 4)
    seg_vmem = tile_n * tile_e2 * 10                  # iota + mask + bf16 seg temporaries
    node_vmem = 2 * tile_n * X_DIM * 2 + tile_n * EMB * (4 + 2 * out_itemsize)
    vmem2 = min(64 * 1024 * 1024,
                max(32 * 1024 * 1024, int(1.5 * (h_vmem + seg_vmem + node_vmem))))

    h_reads = 1 if h_resident else n_node_tiles
    flops2 = 2 * n_pad * e_pad * EMB + 2 * n_pad * (X_DIM + 2 * EMB) * EMB
    bytes2 = (2 * n_pad * X_DIM
              + h_reads * (2 * e_pad * EMB + 4 * e_pad)
              + 2 * (X_DIM + 2 * EMB) * EMB
              + out_itemsize * n_pad * EMB)

    out = pl.pallas_call(
        make_scatter_node_kernel(tile_e2, h_resident),
        out_shape=jax.ShapeDtypeStruct((n_pad, EMB), out_dtype),
        grid_spec=pltpu.PrefetchScalarGridSpec(
            num_scalar_prefetch=0,
            grid=(n_node_tiles, e_tiles2),
            in_specs=[
                pl.BlockSpec((tile_n, X_DIM), lambda i, j: (i, 0)),  # x node tile
                h_spec,                                              # h (resident or tiled)
                recv_spec,                                           # receivers
                pl.BlockSpec((X_DIM, EMB), const),                   # w2x
                pl.BlockSpec((EMB, EMB), const),                     # w2a
                pl.BlockSpec((1, EMB), const),                       # b2
                pl.BlockSpec((EMB, EMB), const),                     # w22
                pl.BlockSpec((1, EMB), const),                       # b22
            ],
            out_specs=pl.BlockSpec((tile_n, EMB), lambda i, j: (i, 0)),
            scratch_shapes=[pltpu.VMEM((tile_n, EMB), jnp.float32)],
        ),
        compiler_params=pltpu.CompilerParams(
            dimension_semantics=("parallel", "arbitrary"),
            vmem_limit_bytes=vmem2),
        cost_estimate=pl.CostEstimate(flops=flops2, transcendentals=0,
                                      bytes_accessed=bytes2),
    )(x_b, h, recv_2d, w2x, w2a, b2, w22, b22)

    return out[:n]


# ---------------------------------------------------------------------------
# Parameters (f32 masters, nn.Linear-shaped; split concat weights).
# ---------------------------------------------------------------------------
def init_params(key):
    ks = jax.random.split(key, 8)
    s0 = 1.0 / jnp.sqrt(3.0 * EMB)
    s1 = 1.0 / jnp.sqrt(1.0 * EMB)
    return {
        "w1x": jax.random.uniform(ks[0], (X_DIM, EMB), jnp.float32, -s0, s0),
        "w1e": jax.random.uniform(ks[1], (EMB, EMB), jnp.float32, -s0, s0),
        "b1":  jax.random.uniform(ks[2], (1, EMB), jnp.float32, -s0, s0),
        "w12": jax.random.uniform(ks[3], (EMB, EMB), jnp.float32, -s1, s1),
        "b12": jax.random.uniform(ks[4], (1, EMB), jnp.float32, -s1, s1),
        "w2x": jax.random.uniform(ks[5], (X_DIM, EMB), jnp.float32, -s0, s0),
        "w2a": jax.random.uniform(ks[6], (EMB, EMB), jnp.float32, -s0, s0),
        "b2":  jax.random.uniform(ks[7], (1, EMB), jnp.float32, -s0, s0),
        "w22": jax.random.uniform(jax.random.fold_in(key, 100), (EMB, EMB),
                                  jnp.float32, -s1, s1),
        "b22": jax.random.uniform(jax.random.fold_in(key, 101), (1, EMB),
                                  jnp.float32, -s1, s1),
    }


# ---------------------------------------------------------------------------
# References: exact f32 PyTorch semantics, and a bf16-matmul emulation that
# mirrors the kernel's mixed-precision numerics (for a tight check).
# ---------------------------------------------------------------------------
def node_model_reference(x, edge_index, edge_attr, params):
    senders, receivers = edge_index[0], edge_index[1]
    h_in = jnp.concatenate([x[senders], edge_attr], axis=1)
    w1 = jnp.concatenate([params["w1x"], params["w1e"]], axis=0)
    h = jnp.maximum(h_in @ w1 + params["b1"], 0.0)
    h = jnp.maximum(h @ params["w12"] + params["b12"], 0.0)
    agg = jnp.zeros((x.shape[0], EMB), jnp.float32).at[receivers].add(h)
    g_in = jnp.concatenate([x, agg], axis=1)
    w2 = jnp.concatenate([params["w2x"], params["w2a"]], axis=0)
    g = jnp.maximum(g_in @ w2 + params["b2"], 0.0)
    return jnp.maximum(g @ params["w22"] + params["b22"], 0.0)


def node_model_reference_bf16(x, edge_index, edge_attr, params):
    bf = jnp.bfloat16
    senders, receivers = edge_index[0], edge_index[1]
    xb = x.astype(bf)
    eb = edge_attr.astype(bf)
    h = (jnp.dot(xb[senders], params["w1x"].astype(bf), preferred_element_type=jnp.float32)
         + jnp.dot(eb, params["w1e"].astype(bf), preferred_element_type=jnp.float32)
         + params["b1"])
    h = jnp.maximum(h, 0.0)
    h = jnp.dot(h.astype(bf), params["w12"].astype(bf),
                preferred_element_type=jnp.float32) + params["b12"]
    h = jnp.maximum(h, 0.0).astype(bf)
    agg = jnp.zeros((x.shape[0], EMB), jnp.float32).at[receivers].add(h.astype(jnp.float32))
    g = (jnp.dot(xb, params["w2x"].astype(bf), preferred_element_type=jnp.float32)
         + jnp.dot(agg.astype(bf), params["w2a"].astype(bf), preferred_element_type=jnp.float32)
         + params["b2"])
    g = jnp.maximum(g, 0.0)
    g = jnp.dot(g.astype(bf), params["w22"].astype(bf),
                preferred_element_type=jnp.float32) + params["b22"]
    return jnp.maximum(g, 0.0)


if __name__ == "__main__":
    key = jax.random.PRNGKey(0)
    k_x, k_e, k_s, k_r, k_p = jax.random.split(key, 5)

    # Small graph; non-multiple sizes exercise padding + the receiver sentinel,
    # and the tile clamping yields a real 2x2 grid in pass 2.
    N_NODES = 60
    N_EDGES = 200

    x = jax.random.normal(k_x, (N_NODES, X_DIM), jnp.float32)
    edge_attr = jax.random.normal(k_e, (N_EDGES, EMB), jnp.float32)
    senders = jax.random.randint(k_s, (N_EDGES,), 0, N_NODES, jnp.int32)
    receivers = jax.random.randint(k_r, (N_EDGES,), 0, N_NODES, jnp.int32)
    edge_index = jnp.stack([senders, receivers], axis=0)
    # u / batch are unused by NodeModel.forward; kept only for signature parity.
    u = jnp.zeros((1, EMB), jnp.float32)
    batch = jnp.zeros((N_NODES,), jnp.int32)

    params = init_params(k_p)

    ref_bf16 = node_model_reference_bf16(x, edge_index, edge_attr, params)
    ref_f32 = node_model_reference(x, edge_index, edge_attr, params)

    # Exercise both pass-2 code paths: h VMEM-resident (auto for this size)
    # and h streamed per edge tile (forced).
    for h_res in (None, False):
        out = node_model_forward(x, edge_index, edge_attr, params,
                                 h_resident=h_res)
        out = jax.block_until_ready(out)
        assert out.shape == (N_NODES, EMB)
        # Tight check vs. a reference with identical mixed-precision numerics.
        assert jnp.allclose(out, ref_bf16, atol=3e-3, rtol=3e-3)
        # Loose sanity check vs. exact f32 PyTorch semantics (bf16 MXU rounding).
        assert float(jnp.max(jnp.abs(out - ref_f32))) < 0.1

    print("KERNEL_OK")
</pallas_src>

<mosaic_0001>
module attributes {stable_mosaic.version = 11 : i64} {
  func.func @edge_mlp_kernel(%arg0: i32, %arg1: memref<128x128xbf16, #tpu.memory_space<vmem>>, %arg2: memref<128x64xbf16, #tpu.memory_space<vmem>>, %arg3: memref<128x64xbf16, #tpu.memory_space<vmem>>, %arg4: memref<64x64xbf16, #tpu.memory_space<vmem>>, %arg5: memref<1x64xf32, #tpu.memory_space<vmem>>, %arg6: memref<64x64xbf16, #tpu.memory_space<vmem>>, %arg7: memref<1x64xf32, #tpu.memory_space<vmem>>, %arg8: memref<128x64xbf16, #tpu.memory_space<vmem>>) attributes {dimension_semantics = [#tpu.dimension_semantics<parallel>], iteration_bounds = array<i64: 2>, scalar_prefetch = 0 : i64, scratch_operands = 0 : i64, tpu.core_type = #tpu.core_type<tc>, window_params = [{transform_indices = @transform_0, window_bounds = array<i64: 128, 128>}, {transform_indices = @transform_1, window_bounds = array<i64: 128, 64>}, {pipeline_mode = #tpu.pipeline_mode<synchronous>, transform_indices = @transform_2, window_bounds = array<i64: 128, 64>}, {pipeline_mode = #tpu.pipeline_mode<synchronous>, transform_indices = @transform_3, window_bounds = array<i64: 64, 64>}, {pipeline_mode = #tpu.pipeline_mode<synchronous>, transform_indices = @transform_4, window_bounds = array<i64: 1, 64>}, {pipeline_mode = #tpu.pipeline_mode<synchronous>, transform_indices = @transform_5, window_bounds = array<i64: 64, 64>}, {pipeline_mode = #tpu.pipeline_mode<synchronous>, transform_indices = @transform_6, window_bounds = array<i64: 1, 64>}, {transform_indices = @transform_7, window_bounds = array<i64: 128, 64>}]} {
    %c0 = arith.constant 0 : index
    %c0_0 = arith.constant 0 : index
    %0 = vector.load %arg1[%c0, %c0_0] : memref<128x128xbf16, #tpu.memory_space<vmem>>, vector<128x128xbf16>
    %c0_1 = arith.constant 0 : index
    %c0_2 = arith.constant 0 : index
    %1 = vector.load %arg3[%c0_1, %c0_2] : memref<128x64xbf16, #tpu.memory_space<vmem>>, vector<128x64xbf16>
    %cst = arith.constant dense<0.000000e+00> : vector<128x64xf32>
    %2 = tpu.matmul %0, %1, %cst {dimension_numbers = #tpu.dot_dimension_numbers<[1], [0], [0], [1], [0, 0, 1, 1], [], []>} : vector<128x128xbf16>, vector<128x64xbf16>, vector<128x64xf32> -> vector<128x64xf32>
    %c0_3 = arith.constant 0 : index
    %c0_4 = arith.constant 0 : index
    %3 = vector.load %arg2[%c0_3, %c0_4] : memref<128x64xbf16, #tpu.memory_space<vmem>>, vector<128x64xbf16>
    %c0_5 = arith.constant 0 : index
    %c0_6 = arith.constant 0 : index
    %4 = vector.load %arg4[%c0_5, %c0_6] : memref<64x64xbf16, #tpu.memory_space<vmem>>, vector<64x64xbf16>
    %cst_7 = arith.constant dense<0.000000e+00> : vector<128x64xf32>
    %5 = tpu.matmul %3, %4, %cst_7 {dimension_numbers = #tpu.dot_dimension_numbers<[1], [0], [0], [1], [0, 0, 1, 1], [], []>} : vector<128x64xbf16>, vector<64x64xbf16>, vector<128x64xf32> -> vector<128x64xf32>
    %6 = arith.addf %2, %5 : vector<128x64xf32>
    %c0_8 = arith.constant 0 : index
    %c0_9 = arith.constant 0 : index
    %7 = vector.load %arg5[%c0_8, %c0_9] : memref<1x64xf32, #tpu.memory_space<vmem>>, vector<1x64xf32>
    %8 = vector.broadcast %7 : vector<1x64xf32> to vector<128x64xf32>
    %9 = arith.addf %6, %8 : vector<128x64xf32>
    %cst_10 = arith.constant 0.000000e+00 : f32
    %10 = vector.broadcast %cst_10 : f32 to vector<128x64xf32>
    %11 = arith.maximumf %9, %10 : vector<128x64xf32>
    %12 = arith.truncf %11 : vector<128x64xf32> to vector<128x64xbf16>
    %c0_11 = arith.constant 0 : index
    %c0_12 = arith.constant 0 : index
    %13 = vector.load %arg6[%c0_11, %c0_12] : memref<64x64xbf16, #tpu.memory_space<vmem>>, vector<64x64xbf16>
    %cst_13 = arith.constant dense<0.000000e+00> : vector<128x64xf32>
    %14 = tpu.matmul %12, %13, %cst_13 {dimension_numbers = #tpu.dot_dimension_numbers<[1], [0], [0], [1], [0, 0, 1, 1], [], []>} : vector<128x64xbf16>, vector<64x64xbf16>, vector<128x64xf32> -> vector<128x64xf32>
    %c0_14 = arith.constant 0 : index
    %c0_15 = arith.constant 0 : index
    %15 = vector.load %arg7[%c0_14, %c0_15] : memref<1x64xf32, #tpu.memory_space<vmem>>, vector<1x64xf32>
    %16 = vector.broadcast %15 : vector<1x64xf32> to vector<128x64xf32>
    %17 = arith.addf %14, %16 : vector<128x64xf32>
    %cst_16 = arith.constant 0.000000e+00 : f32
    %18 = vector.broadcast %cst_16 : f32 to vector<128x64xf32>
    %19 = arith.maximumf %17, %18 : vector<128x64xf32>
    %20 = arith.truncf %19 : vector<128x64xf32> to vector<128x64xbf16>
    %c0_17 = arith.constant 0 : index
    %c0_18 = arith.constant 0 : index
    %21 = vector.load %arg8[%c0_17, %c0_18] : memref<128x64xbf16, #tpu.memory_space<vmem>>, vector<128x64xbf16>
    tpu.vector_store %arg8[%c0_17, %c0_18], %20 {strides = array<i32>} : memref<128x64xbf16, #tpu.memory_space<vmem>>, vector<128x64xbf16>,
    return
  }
  func.func @transform_0(%arg0: i32) -> (i32, i32) {
    %c0_i32 = arith.constant 0 : i32
    %c0_i32_0 = arith.constant 0 : i32
    return %arg0, %c0_i32 : i32, i32
  }
  func.func @transform_1(%arg0: i32) -> (i32, i32) {
    %c0_i32 = arith.constant 0 : i32
    %c0_i32_0 = arith.constant 0 : i32
    return %arg0, %c0_i32 : i32, i32
  }
  func.func @transform_2(%arg0: i32) -> (i32, i32) {
    %c0_i32 = arith.constant 0 : i32
    %c0_i32_0 = arith.constant 0 : i32
    %c0_i32_1 = arith.constant 0 : i32
    return %c0_i32, %c0_i32_0 : i32, i32
  }
  func.func @transform_3(%arg0: i32) -> (i32, i32) {
    %c0_i32 = arith.constant 0 : i32
    %c0_i32_0 = arith.constant 0 : i32
    %c0_i32_1 = arith.constant 0 : i32
    return %c0_i32, %c0_i32_0 : i32, i32
  }
  func.func @transform_4(%arg0: i32) -> (i32, i32) {
    %c0_i32 = arith.constant 0 : i32
    %c0_i32_0 = arith.constant 0 : i32
    %c0_i32_1 = arith.constant 0 : i32
    return %c0_i32, %c0_i32_0 : i32, i32
  }
  func.func @transform_5(%arg0: i32) -> (i32, i32) {
    %c0_i32 = arith.constant 0 : i32
    %c0_i32_0 = arith.constant 0 : i32
    %c0_i32_1 = arith.constant 0 : i32
    return %c0_i32, %c0_i32_0 : i32, i32
  }
  func.func @transform_6(%arg0: i32) -> (i32, i32) {
    %c0_i32 = arith.constant 0 : i32
    %c0_i32_0 = arith.constant 0 : i32
    %c0_i32_1 = arith.constant 0 : i32
    return %c0_i32, %c0_i32_0 : i32, i32
  }
  func.func @transform_7(%arg0: i32) -> (i32, i32) {
    %c0_i32 = arith.constant 0 : i32
    %c0_i32_0 = arith.constant 0 : i32
    return %arg0, %c0_i32 : i32, i32
  }
}

</mosaic_0001>

<llo_original>
// kernel: tpu_custom_call.1
$region0: #{tpu_custom_call.1}
  #allocation0 [shape = 'u32[]', space=smem, size = 0x4, offset = 0x4, fixed_abs, tag = 'smem constant byte address 0x4 - core index']
  #allocation1 [shape = 'u32[144,128]{1,0:T(1,128)}', space=vmem, size = 0x12000, scoped, tag = 'internal scratch']
  %s0 = inlined_call_operand.vmem [shape: bf16[256,128], index: 0, kind: input, shape index: {}]
  %s1 = inlined_call_operand.vmem [shape: bf16[256,64], index: 1, kind: input, shape index: {}]
  %s2 = inlined_call_operand.vmem [shape: bf16[128,64], index: 2, kind: input, shape index: {}]
  %s3 = inlined_call_operand.vmem [shape: bf16[64,64], index: 3, kind: input, shape index: {}]
  %s4 = inlined_call_operand.vmem [shape: f32[1,64], index: 4, kind: input, shape index: {}]
  %s5 = inlined_call_operand.vmem [shape: bf16[64,64], index: 5, kind: input, shape index: {}]
  %s6 = inlined_call_operand.vmem [shape: f32[1,64], index: 6, kind: input, shape index: {}]
  %s7 = inlined_call_operand.vmem [shape: bf16[256,64], index: 7, kind: output, shape index: {}]
  %s8 = sld [smem:[#allocation0]]
  $region61: #{tpu_custom_call.1} parent=0
    _
  %s10 = ssub.s32 1, %s8
  %s11 = scalar_select 0, %s10, %s8
  loop: start=0, step=1, limit=4
  $region2: #{tpu_custom_call.1} parent=0 // loop_pre_header
    _
  $region3: #{tpu_custom_call.1} parent=0 // loop_header
    %s13 = sphi 0, %s17
    %p14 = scmp.ge.s32.totalorder %s13, 4
    %s23 = sphi 0, %s25
    %s26 = sphi 0, %s23
    %s27 = sphi 0, %s26
    %s43 = sphi 0, %s27
    %s49 = sphi 0, %s51
    %s52 = sphi 0, %s49
    %s53 = sphi 0, %s52
    %s69 = sphi 0, %s53
    %s73 = sphi 0, %s73
    %s75 = sphi 0, %s73
    %s76 = sphi 0, %s75
    %s90 = sphi 0, %s76
    %s94 = sphi 0, %s94
    %s96 = sphi 0, %s94
    %s97 = sphi 0, %s96
    %s111 = sphi 0, %s97
    %s115 = sphi 0, %s115
    %s117 = sphi 0, %s115
    %s118 = sphi 0, %s117
    %s132 = sphi 0, %s118
    %s136 = sphi 0, %s136
    %s138 = sphi 0, %s136
    %s139 = sphi 0, %s138
    %s153 = sphi 0, %s139
    %s157 = sphi 0, %s157
    %s159 = sphi 0, %s157
    %s160 = sphi 0, %s159
    %s174 = sphi 0, %s160
    %s180 = sphi 0, %s182
    %s183 = sphi 0, %s180
    %s184 = sphi 0, %s183
    %s200 = sphi 0, %s184
  $region4: #{tpu_custom_call.1} parent=0 // loop_header_branch
    %16 = sbr.rel (%p14) target = $region8
  $region5: #{tpu_custom_call.1} parent=0 // loop_body
    %s18 = ssub.s32 %s13, 1
    %s19 = ssub.s32 %s13, 2
    %s20 = sadd.s32 %s13, 1
    %s21 = ssub.s32 %s13, %s20
    %p22 = scmp.eq.s32.totalorder %s21, 0
    %s24 = sadd.s32 %s23, 1
    %s25 = scalar_select %p22, %s23, %s24
    %p28 = pneg %p22
    %p29 = scmp.eq.s32.totalorder %s13, 1
    %p30 = por %p28, %p29
    %p31 = scmp.ne.s32.totalorder %s23, %s26
    %p32 = scmp.eq.s32.totalorder %s13, 0
    %p33 = por %p31, %p32
    %p34 = scmp.ne.s32.totalorder %s23, %s26
    %p35 = scmp.eq.s32.totalorder %s18, 1
    %p36 = por %p34, %p35
    %p37 = scmp.ne.s32.totalorder %s26, %s27
    %p38 = scmp.eq.s32.totalorder %s18, 0
    %p39 = por %p37, %p38
    %p40 = scmp.ne.s32.totalorder %s26, %s27
    %p41 = scmp.eq.s32.totalorder %s19, 1
    %p42 = por %p40, %p41
    %p44 = scmp.ne.s32.totalorder %s27, %s43
    %p45 = scmp.eq.s32.totalorder %s19, 0
    %p46 = por %p44, %p45
    %s47 = ssub.s32 %s13, %s20
    %p48 = scmp.eq.s32.totalorder %s47, 0
    %s50 = sadd.s32 %s49, 1
    %s51 = scalar_select %p48, %s49, %s50
    %p54 = pneg %p48
    %p55 = scmp.eq.s32.totalorder %s13, 1
    %p56 = por %p54, %p55
    %p57 = scmp.ne.s32.totalorder %s49, %s52
    %p58 = scmp.eq.s32.totalorder %s13, 0
    %p59 = por %p57, %p58
    %p60 = scmp.ne.s32.totalorder %s49, %s52
    %p61 = scmp.eq.s32.totalorder %s18, 1
    %p62 = por %p60, %p61
    %p63 = scmp.ne.s32.totalorder %s52, %s53
    %p64 = scmp.eq.s32.totalorder %s18, 0
    %p65 = por %p63, %p64
    %p66 = scmp.ne.s32.totalorder %s52, %s53
    %p67 = scmp.eq.s32.totalorder %s19, 1
    %p68 = por %p66, %p67
    %p70 = scmp.ne.s32.totalorder %s53, %s69
    %p71 = scmp.eq.s32.totalorder %s19, 0
    %p72 = por %p70, %p71
    %s74 = sadd.s32 %s73, 1
    %p77 = scmp.eq.s32.totalorder %s13, 1
    %p78 = scmp.ne.s32.totalorder %s73, %s75
    %p79 = scmp.eq.s32.totalorder %s13, 0
    %p80 = por %p78, %p79
    %p81 = scmp.ne.s32.totalorder %s73, %s75
    %p82 = scmp.eq.s32.totalorder %s18, 1
    %p83 = por %p81, %p82
    %p84 = scmp.ne.s32.totalorder %s75, %s76
    %p85 = scmp.eq.s32.totalorder %s18, 0
    %p86 = por %p84, %p85
    %p87 = scmp.ne.s32.totalorder %s75, %s76
    %p88 = scmp.eq.s32.totalorder %s19, 1
    %p89 = por %p87, %p88
    %p91 = scmp.ne.s32.totalorder %s76, %s90
    %p92 = scmp.eq.s32.totalorder %s19, 0
    %p93 = por %p91, %p92
    %s95 = sadd.s32 %s94, 1
    %p98 = scmp.eq.s32.totalorder %s13, 1
    %p99 = scmp.ne.s32.totalorder %s94, %s96
    %p100 = scmp.eq.s32.totalorder %s13, 0
    %p101 = por %p99, %p100
    %p102 = scmp.ne.s32.totalorder %s94, %s96
    %p103 = scmp.eq.s32.totalorder %s18, 1
    %p104 = por %p102, %p103
    %p105 = scmp.ne.s32.totalorder %s96, %s97
    %p106 = scmp.eq.s32.totalorder %s18, 0
    %p107 = por %p105, %p106
    %p108 = scmp.ne.s32.totalorder %s96, %s97
    %p109 = scmp.eq.s32.totalorder %s19, 1
    %p110 = por %p108, %p109
    %p112 = scmp.ne.s32.totalorder %s97, %s111
    %p113 = scmp.eq.s32.totalorder %s19, 0
    %p114 = por %p112, %p113
    %s116 = sadd.s32 %s115, 1
    %p119 = scmp.eq.s32.totalorder %s13, 1
    %p120 = scmp.ne.s32.totalorder %s115, %s117
    %p121 = scmp.eq.s32.totalorder %s13, 0
    %p122 = por %p120, %p121
    %p123 = scmp.ne.s32.totalorder %s115, %s117
    %p124 = scmp.eq.s32.totalorder %s18, 1
    %p125 = por %p123, %p124
    %p126 = scmp.ne.s32.totalorder %s117, %s118
    %p127 = scmp.eq.s32.totalorder %s18, 0
    %p128 = por %p126, %p127
    %p129 = scmp.ne.s32.totalorder %s117, %s118
    %p130 = scmp.eq.s32.totalorder %s19, 1
    %p131 = por %p129, %p130
    %p133 = scmp.ne.s32.totalorder %s118, %s132
    %p134 = scmp.eq.s32.totalorder %s19, 0
    %p135 = por %p133, %p134
    %s137 = sadd.s32 %s136, 1
    %p140 = scmp.eq.s32.totalorder %s13, 1
    %p141 = scmp.ne.s32.totalorder %s136, %s138
    %p142 = scmp.eq.s32.totalorder %s13, 0
    %p143 = por %p141, %p142
    %p144 = scmp.ne.s32.totalorder %s136, %s138
    %p145 = scmp.eq.s32.totalorder %s18, 1
    %p146 = por %p144, %p145
    %p147 = scmp.ne.s32.totalorder %s138, %s139
    %p148 = scmp.eq.s32.totalorder %s18, 0
    %p149 = por %p147, %p148
    %p150 = scmp.ne.s32.totalorder %s138, %s139
    %p151 = scmp.eq.s32.totalorder %s19, 1
    %p152 = por %p150, %p151
    %p154 = scmp.ne.s32.totalorder %s139, %s153
    %p155 = scmp.eq.s32.totalorder %s19, 0
    %p156 = por %p154, %p155
    %s158 = sadd.s32 %s157, 1
    %p161 = scmp.eq.s32.totalorder %s13, 1
    %p162 = scmp.ne.s32.totalorder %s157, %s159
    %p163 = scmp.eq.s32.totalorder %s13, 0
    %p164 = por %p162, %p163
    %p165 = scmp.ne.s32.totalorder %s157, %s159
    %p166 = scmp.eq.s32.totalorder %s18, 1
    %p167 = por %p165, %p166
    %p168 = scmp.ne.s32.totalorder %s159, %s160
    %p169 = scmp.eq.s32.totalorder %s18, 0
    %p170 = por %p168, %p169
    %p171 = scmp.ne.s32.totalorder %s159, %s160
    %p172 = scmp.eq.s32.totalorder %s19, 1
    %p173 = por %p171, %p172
    %p175 = scmp.ne.s32.totalorder %s160, %s174
    %p176 = scmp.eq.s32.totalorder %s19, 0
    %p177 = por %p175, %p176
    %s178 = ssub.s32 %s13, %s20
    %p179 = scmp.eq.s32.totalorder %s178, 0
    %s181 = sadd.s32 %s180, 1
    %s182 = scalar_select %p179, %s180, %s181
    %p185 = pneg %p179
    %p186 = scmp.eq.s32.totalorder %s13, 1
    %p187 = por %p185, %p186
    %p188 = scmp.ne.s32.totalorder %s180, %s183
    %p189 = scmp.eq.s32.totalorder %s13, 0
    %p190 = por %p188, %p189
    %p191 = scmp.ne.s32.totalorder %s180, %s183
    %p192 = scmp.eq.s32.totalorder %s18, 1
    %p193 = por %p191, %p192
    %p194 = scmp.ne.s32.totalorder %s183, %s184
    %p195 = scmp.eq.s32.totalorder %s18, 0
    %p196 = por %p194, %p195
    %p197 = scmp.ne.s32.totalorder %s183, %s184
    %p198 = scmp.eq.s32.totalorder %s19, 1
    %p199 = por %p197, %p198
    %p201 = scmp.ne.s32.totalorder %s184, %s200
    %p202 = scmp.eq.s32.totalorder %s19, 0
    %p203 = por %p201, %p202
    %p204 = scmp.le.s32.totalorder 1, %s13
    %p205 = scmp.lt.s32.totalorder %s13, 3
    %p206 = pnand %p204, %p205
    %p207 = pneg %p206
    // Predicated region
    $region9: #{tpu_custom_call.1} parent=5 // pred_check
      _
    $region10: #{tpu_custom_call.1} parent=5 // pred_check_branch
      %209 = sbr.rel (%p206) target = $region12
    $region11: #{tpu_custom_call.1} parent=5 // pred_region
      %s210 = ssub.s32 %s13, 1
      // Predicated region
      $region13: #{tpu_custom_call.1} parent=11 // pred_check
        %p211 = pneg %p86
      $region14: #{tpu_custom_call.1} parent=11 // pred_check_branch
        %213 = sbr.rel (%p211) target = $region16
      $region15: #{tpu_custom_call.1} parent=11 // pred_region
        _
      $region16: #{tpu_custom_call.1} parent=11 // pred_fallthru
        _
      // Predicated region
      $region17: #{tpu_custom_call.1} parent=11 // pred_check
        %p214 = pneg %p107
      $region18: #{tpu_custom_call.1} parent=11 // pred_check_branch
        %216 = sbr.rel (%p214) target = $region20
      $region19: #{tpu_custom_call.1} parent=11 // pred_region
        _
      $region20: #{tpu_custom_call.1} parent=11 // pred_fallthru
        _
      // Predicated region
      $region21: #{tpu_custom_call.1} parent=11 // pred_check
        %p217 = pneg %p128
      $region22: #{tpu_custom_call.1} parent=11 // pred_check_branch
        %219 = sbr.rel (%p217) target = $region24
      $region23: #{tpu_custom_call.1} parent=11 // pred_region
        _
      $region24: #{tpu_custom_call.1} parent=11 // pred_fallthru
        _
      // Predicated region
      $region25: #{tpu_custom_call.1} parent=11 // pred_check
        %p220 = pneg %p149
      $region26: #{tpu_custom_call.1} parent=11 // pred_check_branch
        %222 = sbr.rel (%p220) target = $region28
      $region27: #{tpu_custom_call.1} parent=11 // pred_region
        _
      $region28: #{tpu_custom_call.1} parent=11 // pred_fallthru
        _
      // Predicated region
      $region29: #{tpu_custom_call.1} parent=11 // pred_check
        %p223 = pneg %p170
      $region30: #{tpu_custom_call.1} parent=11 // pred_check_branch
        %225 = sbr.rel (%p223) target = $region32
      $region31: #{tpu_custom_call.1} parent=11 // pred_region
        _
      $region32: #{tpu_custom_call.1} parent=11 // pred_fallthru
        _
    $region12: #{tpu_custom_call.1} parent=5 // pred_fallthru
      _
    %p226 = scmp.lt.s32.totalorder %s13, 2
    // Predicated region
    $region33: #{tpu_custom_call.1} parent=5 // pred_check
      %p227 = pneg %p226
    $region34: #{tpu_custom_call.1} parent=5 // pred_check_branch
      %229 = sbr.rel (%p227) target = $region36
    $region35: #{tpu_custom_call.1} parent=5 // pred_region
      // Predicated region
      $region37: #{tpu_custom_call.1} parent=35 // pred_check
        %p230 = pneg %p33
      $region38: #{tpu_custom_call.1} parent=35 // pred_check_branch
        %232 = sbr.rel (%p230) target = $region40
      $region39: #{tpu_custom_call.1} parent=35 // pred_region
        %s233 = smul.u32 16, %s13
        %p234 = scmp.lt.s32.totalorder %s233, 31
        %s235 = scalar_select %p234, %s233, 31
        %s236 = smul.addr %s235, 4
        %s237 = scalar_lea.vmem %s0, %s236
        %s238 = smul.u32 16, %s13
      $region40: #{tpu_custom_call.1} parent=35 // pred_fallthru
        _
      // Predicated region
      $region41: #{tpu_custom_call.1} parent=35 // pred_check
        %p239 = pneg %p59
      $region42: #{tpu_custom_call.1} parent=35 // pred_check_branch
        %241 = sbr.rel (%p239) target = $region44
      $region43: #{tpu_custom_call.1} parent=35 // pred_region
        %s242 = smul.u32 16, %s13
        %p243 = scmp.lt.s32.totalorder %s242, 31
        %s244 = scalar_select %p243, %s242, 31
        %s245 = smul.addr %s244, 4
        %s246 = scalar_lea.vmem %s1, %s245
        %s247 = smul.u32 16, %s13
      $region44: #{tpu_custom_call.1} parent=35 // pred_fallthru
        _
    $region36: #{tpu_custom_call.1} parent=5 // pred_fallthru
      _
    %p248 = scmp.le.s32.totalorder 1, %s13
    %p249 = scmp.lt.s32.totalorder %s13, 3
    %p250 = pnand %p248, %p249
    %p251 = pneg %p250
    // Predicated region
    $region45: #{tpu_custom_call.1} parent=5 // pred_check
      _
    $region46: #{tpu_custom_call.1} parent=5 // pred_check_branch
      %253 = sbr.rel (%p250) target = $region48
    $region47: #{tpu_custom_call.1} parent=5 // pred_region
      %s254 = ssub.s32 %s13, 1
      %s255 = smul.u32 16, %s18
      %p256 = scmp.lt.s32.totalorder %s255, 31
      %s257 = scalar_select %p256, %s255, 31
      %s258 = smul.addr %s257, 4
      %s259 = scalar_lea.vmem %s0, %s258
      %p260 = pneg %p39
      %p261 = pneg %p36
      %s262 = smul.u32 16, %s18
      %p263 = scmp.lt.s32.totalorder %s262, 31
      %s264 = scalar_select %p263, %s262, 31
      %s265 = smul.addr %s264, 4
      %s266 = scalar_lea.vmem %s1, %s265
      %p267 = pneg %p65
      %p268 = pneg %p62
      %p269 = pneg %p86
      %p270 = pneg %p83
      %p271 = pneg %p107
      %p272 = pneg %p104
      %p273 = pneg %p128
      %p274 = pneg %p125
      %p275 = pneg %p149
      %p276 = pneg %p146
      %p277 = pneg %p170
      %p278 = pneg %p167
      %p279 = pneg %p196
      %p280 = pneg %p193
      %s281 = smul.u32 16, %s18
      %p282 = scmp.lt.s32.totalorder %s281, 31
      %s283 = scalar_select %p282, %s281, 31
      %s284 = smul.addr %s283, 4
      %s285 = scalar_lea.vmem %s7, %s284
      %s286 = smul.u32 16, %s18
      %p287 = scmp.lt.s32.totalorder %s286, 31
      %s288 = scalar_select %p287, %s286, 31
      %s289 = smul.addr %s288, 4
      %s290 = scalar_lea.vmem %s0, %s289
      %s291 = smul.u32 16, %s18
      %s292 = smul.u32 16, %s18
      %p293 = scmp.lt.s32.totalorder %s292, 31
      %s294 = scalar_select %p293, %s292, 31
      %s295 = smul.addr %s294, 4
      %s296 = scalar_lea.vmem %s1, %s295
      %s297 = smul.u32 16, %s18
      %s298 = smul.u32 16, %s18
      %p299 = scmp.lt.s32.totalorder %s298, 31
      %s300 = scalar_select %p299, %s298, 31
      %s301 = smul.addr %s300, 4
      %s302 = scalar_lea.vmem %s7, %s301
      %s303 = smul.u32 16, %s18
      %v305 = vld [vmem:[%s290] sm:$0xf]
      %v306 = vld [vmem:[%s290 + $0x4] sm:$0xf]
      %v307 = vld [vmem:[%s290 + $0x8] sm:$0xf]
      %v308 = vld [vmem:[%s290 + $0xc] sm:$0xf]
      %v309 = vld [vmem:[%s290 + $0x10] sm:$0xf]
      %v310 = vld [vmem:[%s290 + $0x14] sm:$0xf]
      %v311 = vld [vmem:[%s290 + $0x18] sm:$0xf]
      %v312 = vld [vmem:[%s290 + $0x1c] sm:$0xf]
      %v313 = vld [vmem:[%s290 + $0x20] sm:$0xf]
      %v314 = vld [vmem:[%s290 + $0x24] sm:$0xf]
      %v315 = vld [vmem:[%s290 + $0x28] sm:$0xf]
      %v316 = vld [vmem:[%s290 + $0x2c] sm:$0xf]
      %v317 = vld [vmem:[%s290 + $0x30] sm:$0xf]
      %v318 = vld [vmem:[%s290 + $0x34] sm:$0xf]
      %v319 = vld [vmem:[%s290 + $0x38] sm:$0xf]
      %v320 = vld [vmem:[%s290 + $0x3c] sm:$0xf]
      %v321 = vld [vmem:[%s2] sm:$0xf]
      %v322 = vld [vmem:[%s2 + $0x4] sm:$0xf]
      %v323 = vld [vmem:[%s2 + $0x8] sm:$0xf]
      %v324 = vld [vmem:[%s2 + $0xc] sm:$0xf]
      %v325 = vld [vmem:[%s2 + $0x10] sm:$0xf]
      %v326 = vld [vmem:[%s2 + $0x14] sm:$0xf]
      %v327 = vld [vmem:[%s2 + $0x18] sm:$0xf]
      %v328 = vld [vmem:[%s2 + $0x1c] sm:$0xf]
      %v329 = vld [vmem:[%s2 + $0x20] sm:$0xf]
      %v330 = vld [vmem:[%s2 + $0x24] sm:$0xf]
      %v331 = vld [vmem:[%s2 + $0x28] sm:$0xf]
      %v332 = vld [vmem:[%s2 + $0x2c] sm:$0xf]
      %v333 = vld [vmem:[%s2 + $0x30] sm:$0xf]
      %v334 = vld [vmem:[%s2 + $0x34] sm:$0xf]
      %v335 = vld [vmem:[%s2 + $0x38] sm:$0xf]
      %v336 = vld [vmem:[%s2 + $0x3c] sm:$0xf]
      %v337 = vld [vmem:[%s296] sm:$0xf]
      %v338 = vld [vmem:[%s296 + $0x4] sm:$0xf]
      %v339 = vld [vmem:[%s296 + $0x8] sm:$0xf]
      %v340 = vld [vmem:[%s296 + $0xc] sm:$0xf]
      %v341 = vld [vmem:[%s296 + $0x10] sm:$0xf]
      %v342 = vld [vmem:[%s296 + $0x14] sm:$0xf]
      %v343 = vld [vmem:[%s296 + $0x18] sm:$0xf]
      %v344 = vld [vmem:[%s296 + $0x1c] sm:$0xf]
      %v345 = vld [vmem:[%s296 + $0x20] sm:$0xf]
      %v346 = vld [vmem:[%s296 + $0x24] sm:$0xf]
      %v347 = vld [vmem:[%s296 + $0x28] sm:$0xf]
      %v348 = vld [vmem:[%s296 + $0x2c] sm:$0xf]
      %v349 = vld [vmem:[%s296 + $0x30] sm:$0xf]
      %v350 = vld [vmem:[%s296 + $0x34] sm:$0xf]
      %v351 = vld [vmem:[%s296 + $0x38] sm:$0xf]
      %v352 = vld [vmem:[%s296 + $0x3c] sm:$0xf]
      %v353 = vld [vmem:[%s3] sm:$0xf]
      %v354 = vld [vmem:[%s3 + $0x4] sm:$0xf]
      %v355 = vld [vmem:[%s3 + $0x8] sm:$0xf]
      %v356 = vld [vmem:[%s3 + $0xc] sm:$0xf]
      %v357 = vld [vmem:[%s3 + $0x10] sm:$0xf]
      %v358 = vld [vmem:[%s3 + $0x14] sm:$0xf]
      %v359 = vld [vmem:[%s3 + $0x18] sm:$0xf]
      %v360 = vld [vmem:[%s3 + $0x1c] sm:$0xf]
      %v377 = vunpack.c.l.b16 %v337
      %v378 = vunpack.c.l.b16 %v338
      %v379 = vunpack.c.l.b16 %v339
      %v380 = vunpack.c.l.b16 %v340
      %v381 = vunpack.c.l.b16 %v341
      %v382 = vunpack.c.l.b16 %v342
      %v383 = vunpack.c.l.b16 %v343
      %v384 = vunpack.c.l.b16 %v344
      %v385 = vunpack.c.l.b16 %v345
      %v386 = vunpack.c.l.b16 %v346
      %v387 = vunpack.c.l.b16 %v347
      %v388 = vunpack.c.l.b16 %v348
      %v389 = vunpack.c.l.b16 %v349
      %v390 = vunpack.c.l.b16 %v350
      %v391 = vunpack.c.l.b16 %v351
      %v392 = vunpack.c.l.b16 %v352
      %v393 = vpack.c.b16 %v378, %v377
      %v394 = vpack.c.b16 %v380, %v379
      %v395 = vpack.c.b16 %v382, %v381
      %v396 = vpack.c.b16 %v384, %v383
      %v397 = vpack.c.b16 %v386, %v385
      %v398 = vpack.c.b16 %v388, %v387
      %v399 = vpack.c.b16 %v390, %v389
      %v400 = vpack.c.b16 %v392, %v391
      %v409 = vunpack.c.l.b16 %v353
      %v410 = vunpack.c.l.b16 %v354
      %v411 = vunpack.c.l.b16 %v355
      %v412 = vunpack.c.l.b16 %v356
      %v413 = vunpack.c.l.b16 %v357
      %v414 = vunpack.c.l.b16 %v358
      %v415 = vunpack.c.l.b16 %v359
      %v416 = vunpack.c.l.b16 %v360
      %v417 = vpack.c.b16 %v410, %v409
      %v418 = vpack.c.b16 %v412, %v411
      %v419 = vpack.c.b16 %v414, %v413
      %v420 = vpack.c.b16 %v416, %v415
      %vm425 = vcmask 523264
      %v427 = vsel %vm425, %v393, 0
      %v430 = vsel %vm425, %v394, 0
      %v433 = vsel %vm425, %v395, 0
      %v436 = vsel %vm425, %v396, 0
      %v439 = vsel %vm425, %v397, 0
      %v442 = vsel %vm425, %v398, 0
      %v445 = vsel %vm425, %v399, 0
      %v448 = vsel %vm425, %v400, 0
      %450 = vmatprep.subr.bf16.mxu0 0
      %451 = vmatpush1.bf16.msra.mxu0 0
      %452 = vmatprep.subr.bf16.mxu0 0
      %453 = vmatpush1.bf16.msra.mxu0 0
      %454 = vmatprep.subr.bf16.mxu0 0
      %455 = vmatpush1.bf16.msra.mxu0 0
      %456 = vmatprep.subr.bf16.mxu0 0
      %457 = vmatpush1.bf16.msra.mxu0 0
      %458 = vmatprep.subr.bf16.mxu0 0
      %459 = vmatpush1.bf16.msra.mxu0 %v420
      %460 = vmatprep.subr.bf16.mxu0 0
      %461 = vmatpush1.bf16.msra.mxu0 %v419
      %462 = vmatprep.subr.bf16.mxu0 0
      %463 = vmatpush1.bf16.msra.mxu0 %v418
      %464 = vmatprep.subr.bf16.mxu0 0
      %465 = vmatpush1.bf16.msra.mxu0 %v417
      %466 = vmatprep.subr.bf16.mxu0 0
      %467 = vmatpush2.bf16.msra.mxu0 0
      %468 = vmatprep.subr.bf16.mxu0 0
      %469 = vmatpush2.bf16.msra.mxu0 0
      %470 = vmatprep.subr.bf16.mxu0 0
      %471 = vmatpush2.bf16.msra.mxu0 0
      %472 = vmatprep.subr.bf16.mxu0 0
      %473 = vmatpush2.bf16.msra.mxu0 0
      %474 = vmatprep.subr.bf16.mxu0 0
      %475 = vmatpush2.bf16.msra.mxu0 0
      %476 = vmatprep.subr.bf16.mxu0 0
      %477 = vmatpush2.bf16.msra.mxu0 0
      %478 = vmatprep.subr.bf16.mxu0 0
      %479 = vmatpush2.bf16.msra.mxu0 0
      %480 = vmatprep.subr.bf16.mxu0 0
      %481 = vmatpush2.bf16.msra.mxu0 0
      %482 = vmatprep.mubr.bf16.mxu0 0
      %483 = vmatmul.mubr.bf16.gmra.mxu0 %v427
      %v484 = vpop.f32.mrf.mxu0
      %v485 = vadd.f32 0.0, %v484
      %v486 = vpop.f32.mrf.mxu0
      %v487 = vpop.f32.mrf.mxu0
      %v488 = vadd.f32 0.0, %v487
      %v489 = vpop.f32.mrf.mxu0
      %490 = vmatprep.mubr.bf16.mxu0 0
      %491 = vmatmul.mubr.bf16.gmra.mxu0 %v430
      %v492 = vpop.f32.mrf.mxu0
      %v493 = vadd.f32 0.0, %v492
      %v494 = vpop.f32.mrf.mxu0
      %v495 = vpop.f32.mrf.mxu0
      %v496 = vadd.f32 0.0, %v495
      %v497 = vpop.f32.mrf.mxu0
      %498 = vmatprep.mubr.bf16.mxu0 0
      %499 = vmatmul.mubr.bf16.gmra.mxu0 %v433
      %v500 = vpop.f32.mrf.mxu0
      %v501 = vadd.f32 0.0, %v500
      %v502 = vpop.f32.mrf.mxu0
      %v503 = vpop.f32.mrf.mxu0
      %v504 = vadd.f32 0.0, %v503
      %v505 = vpop.f32.mrf.mxu0
      %506 = vmatprep.mubr.bf16.mxu0 0
      %507 = vmatmul.mubr.bf16.gmra.mxu0 %v436
      %v508 = vpop.f32.mrf.mxu0
      %v509 = vadd.f32 0.0, %v508
      %v510 = vpop.f32.mrf.mxu0
      %v511 = vpop.f32.mrf.mxu0
      %v512 = vadd.f32 0.0, %v511
      %v513 = vpop.f32.mrf.mxu0
      %514 = vmatprep.mubr.bf16.mxu0 0
      %515 = vmatmul.mubr.bf16.gmra.mxu0 %v439
      %v516 = vpop.f32.mrf.mxu0
      %v517 = vadd.f32 0.0, %v516
      %v518 = vpop.f32.mrf.mxu0
      %v519 = vpop.f32.mrf.mxu0
      %v520 = vadd.f32 0.0, %v519
      %v521 = vpop.f32.mrf.mxu0
      %522 = vmatprep.mubr.bf16.mxu0 0
      %523 = vmatmul.mubr.bf16.gmra.mxu0 %v442
      %v524 = vpop.f32.mrf.mxu0
      %v525 = vadd.f32 0.0, %v524
      %v526 = vpop.f32.mrf.mxu0
      %v527 = vpop.f32.mrf.mxu0
      %v528 = vadd.f32 0.0, %v527
      %v529 = vpop.f32.mrf.mxu0
      %530 = vmatprep.mubr.bf16.mxu0 0
      %531 = vmatmul.mubr.bf16.gmra.mxu0 %v445
      %v532 = vpop.f32.mrf.mxu0
      %v533 = vadd.f32 0.0, %v532
      %v534 = vpop.f32.mrf.mxu0
      %v535 = vpop.f32.mrf.mxu0
      %v536 = vadd.f32 0.0, %v535
      %v537 = vpop.f32.mrf.mxu0
      %538 = vmatprep.mubr.bf16.mxu0 0
      %539 = vmatmul.mubr.bf16.gmra.mxu0 %v448
      %v540 = vpop.f32.mrf.mxu0
      %v541 = vadd.f32 0.0, %v540
      %v542 = vpop.f32.mrf.mxu0
      %v543 = vpop.f32.mrf.mxu0
      %v544 = vadd.f32 0.0, %v543
      %v545 = vpop.f32.mrf.mxu0
      %546 = vdwg.mxu0
      %v563 = vunpack.c.l.b16 %v305
      %v564 = vunpack.c.l.b16 %v306
      %v565 = vunpack.c.l.b16 %v307
      %v566 = vunpack.c.l.b16 %v308
      %v567 = vunpack.c.l.b16 %v309
      %v568 = vunpack.c.l.b16 %v310
      %v569 = vunpack.c.l.b16 %v311
      %v570 = vunpack.c.l.b16 %v312
      %v571 = vunpack.c.l.b16 %v313
      %v572 = vunpack.c.l.b16 %v314
      %v573 = vunpack.c.l.b16 %v315
      %v574 = vunpack.c.l.b16 %v316
      %v575 = vunpack.c.l.b16 %v317
      %v576 = vunpack.c.l.b16 %v318
      %v577 = vunpack.c.l.b16 %v319
      %v578 = vunpack.c.l.b16 %v320
      %v579 = vpack.c.b16 %v564, %v563
      %v580 = vpack.c.b16 %v566, %v565
      %v581 = vpack.c.b16 %v568, %v567
      %v582 = vpack.c.b16 %v570, %v569
      %v583 = vpack.c.b16 %v572, %v571
      %v584 = vpack.c.b16 %v574, %v573
      %v585 = vpack.c.b16 %v576, %v575
      %v586 = vpack.c.b16 %v578, %v577
      %v611 = vunpack.c.l.b16 %v321
      %v612 = vunpack.c.l.b16 %v322
      %v613 = vunpack.c.l.b16 %v323
      %v614 = vunpack.c.l.b16 %v324
      %v615 = vunpack.c.l.b16 %v325
      %v616 = vunpack.c.l.b16 %v326
      %v617 = vunpack.c.l.b16 %v327
      %v618 = vunpack.c.l.b16 %v328
      %v619 = vunpack.c.l.b16 %v329
      %v620 = vunpack.c.l.b16 %v330
      %v621 = vunpack.c.l.b16 %v331
      %v622 = vunpack.c.l.b16 %v332
      %v623 = vunpack.c.l.b16 %v333
      %v624 = vunpack.c.l.b16 %v334
      %v625 = vunpack.c.l.b16 %v335
      %v626 = vunpack.c.l.b16 %v336
      %v627 = vpack.c.b16 %v612, %v611
      %v628 = vpack.c.b16 %v614, %v613
      %v629 = vpack.c.b16 %v616, %v615
      %v630 = vpack.c.b16 %v618, %v617
      %v631 = vpack.c.b16 %v620, %v619
      %v632 = vpack.c.b16 %v622, %v621
      %v633 = vpack.c.b16 %v624, %v623
      %v634 = vpack.c.b16 %v626, %v625
      %643 = vmatprep.subr.bf16.mxu0 0
      %644 = vmatpush1.bf16.msra.mxu0 %v634
      %645 = vmatprep.subr.bf16.mxu0 0
      %646 = vmatpush1.bf16.msra.mxu0 %v633
      %647 = vmatprep.subr.bf16.mxu0 0
      %648 = vmatpush1.bf16.msra.mxu0 %v632
      %649 = vmatprep.subr.bf16.mxu0 0
      %650 = vmatpush1.bf16.msra.mxu0 %v631
      %651 = vmatprep.subr.bf16.mxu0 0
      %652 = vmatpush1.bf16.msra.mxu0 %v630
      %653 = vmatprep.subr.bf16.mxu0 0
      %654 = vmatpush1.bf16.msra.mxu0 %v629
      %655 = vmatprep.subr.bf16.mxu0 0
      %656 = vmatpush1.bf16.msra.mxu0 %v628
      %657 = vmatprep.subr.bf16.mxu0 0
      %658 = vmatpush1.bf16.msra.mxu0 %v627
      %659 = vmatprep.subr.bf16.mxu0 0
      %660 = vmatpush2.bf16.msra.mxu0 0
      %661 = vmatprep.subr.bf16.mxu0 0
      %662 = vmatpush2.bf16.msra.mxu0 0
      %663 = vmatprep.subr.bf16.mxu0 0
      %664 = vmatpush2.bf16.msra.mxu0 0
      %665 = vmatprep.subr.bf16.mxu0 0
      %666 = vmatpush2.bf16.msra.mxu0 0
      %667 = vmatprep.subr.bf16.mxu0 0
      %668 = vmatpush2.bf16.msra.mxu0 0
      %669 = vmatprep.subr.bf16.mxu0 0
      %670 = vmatpush2.bf16.msra.mxu0 0
      %671 = vmatprep.subr.bf16.mxu0 0
      %672 = vmatpush2.bf16.msra.mxu0 0
      %673 = vmatprep.subr.bf16.mxu0 0
      %674 = vmatpush2.bf16.msra.mxu0 0
      %675 = vmatprep.mubr.bf16.mxu0 0
      %676 = vmatmul.mubr.bf16.gmra.mxu0 %v579
      %v677 = vpop.f32.mrf.mxu0
      %v678 = vadd.f32 %v485, %v677
      %v679 = vpop.f32.mrf.mxu0
      %v680 = vpop.f32.mrf.mxu0
      %v681 = vadd.f32 %v488, %v680
      %v682 = vpop.f32.mrf.mxu0
      %683 = vmatprep.mubr.bf16.mxu0 0
      %684 = vmatmul.mubr.bf16.gmra.mxu0 %v580
      %v685 = vpop.f32.mrf.mxu0
      %v686 = vadd.f32 %v493, %v685
      %v687 = vpop.f32.mrf.mxu0
      %v688 = vpop.f32.mrf.mxu0
      %v689 = vadd.f32 %v496, %v688
      %v690 = vpop.f32.mrf.mxu0
      %691 = vmatprep.mubr.bf16.mxu0 0
      %692 = vmatmul.mubr.bf16.gmra.mxu0 %v581
      %v693 = vpop.f32.mrf.mxu0
      %v694 = vadd.f32 %v501, %v693
      %v695 = vpop.f32.mrf.mxu0
      %v696 = vpop.f32.mrf.mxu0
      %v697 = vadd.f32 %v504, %v696
      %v698 = vpop.f32.mrf.mxu0
      %699 = vmatprep.mubr.bf16.mxu0 0
      %700 = vmatmul.mubr.bf16.gmra.mxu0 %v582
      %v701 = vpop.f32.mrf.mxu0
      %v702 = vadd.f32 %v509, %v701
      %v703 = vpop.f32.mrf.mxu0
      %v704 = vpop.f32.mrf.mxu0
      %v705 = vadd.f32 %v512, %v704
      %v706 = vpop.f32.mrf.mxu0
      %707 = vmatprep.mubr.bf16.mxu0 0
      %708 = vmatmul.mubr.bf16.gmra.mxu0 %v583
      %v709 = vpop.f32.mrf.mxu0
      %v710 = vadd.f32 %v517, %v709
      %v711 = vpop.f32.mrf.mxu0
      %v712 = vpop.f32.mrf.mxu0
      %v713 = vadd.f32 %v520, %v712
      %v714 = vpop.f32.mrf.mxu0
      %715 = vmatprep.mubr.bf16.mxu0 0
      %716 = vmatmul.mubr.bf16.gmra.mxu0 %v584
      %v717 = vpop.f32.mrf.mxu0
      %v718 = vadd.f32 %v525, %v717
      %v719 = vpop.f32.mrf.mxu0
      %v720 = vpop.f32.mrf.mxu0
      %v721 = vadd.f32 %v528, %v720
      %v722 = vpop.f32.mrf.mxu0
      %723 = vmatprep.mubr.bf16.mxu0 0
      %724 = vmatmul.mubr.bf16.gmra.mxu0 %v585
      %v725 = vpop.f32.mrf.mxu0
      %v726 = vadd.f32 %v533, %v725
      %v727 = vpop.f32.mrf.mxu0
      %v728 = vpop.f32.mrf.mxu0
      %v729 = vadd.f32 %v536, %v728
      %v730 = vpop.f32.mrf.mxu0
      %731 = vmatprep.mubr.bf16.mxu0 0
      %732 = vmatmul.mubr.bf16.gmra.mxu0 %v586
      %v733 = vpop.f32.mrf.mxu0
      %v734 = vadd.f32 %v541, %v733
      %v735 = vpop.f32.mrf.mxu0
      %v736 = vpop.f32.mrf.mxu0
      %v737 = vadd.f32 %v544, %v736
      %v738 = vpop.f32.mrf.mxu0
      %739 = vdwg.mxu0
      %v740 = vld [vmem:[%s4] sm:$0x1]
      %v742 = vlaneseq
      %v743 = vshrl.u32 %v742, 7
      %v744 = vsub.s32 0, %v743
      %v745 = vrot.slane %v740, %v744
      %v747 = vadd.f32 %v678, %v745
      %v748 = vadd.f32 %v681, %v745
      %v749 = vadd.f32 %v686, %v745
      %v750 = vadd.f32 %v689, %v745
      %v751 = vadd.f32 %v694, %v745
      %v752 = vadd.f32 %v697, %v745
      %v753 = vadd.f32 %v702, %v745
      %v754 = vadd.f32 %v705, %v745
      %v755 = vadd.f32 %v710, %v745
      %v756 = vadd.f32 %v713, %v745
      %v757 = vadd.f32 %v718, %v745
      %v758 = vadd.f32 %v721, %v745
      %v759 = vadd.f32 %v726, %v745
      %v760 = vadd.f32 %v729, %v745
      %v761 = vadd.f32 %v734, %v745
      %v762 = vadd.f32 %v737, %v745
      %v763 = vmax.f32 %v747, 0.0
      %v764 = vmax.f32 %v748, 0.0
      %v765 = vmax.f32 %v749, 0.0
      %v766 = vmax.f32 %v750, 0.0
      %v767 = vmax.f32 %v751, 0.0
      %v768 = vmax.f32 %v752, 0.0
      %v769 = vmax.f32 %v753, 0.0
      %v770 = vmax.f32 %v754, 0.0
      %v771 = vmax.f32 %v755, 0.0
      %v772 = vmax.f32 %v756, 0.0
      %v773 = vmax.f32 %v757, 0.0
      %v774 = vmax.f32 %v758, 0.0
      %v775 = vmax.f32 %v759, 0.0
      %v776 = vmax.f32 %v760, 0.0
      %v777 = vmax.f32 %v761, 0.0
      %v778 = vmax.f32 %v762, 0.0
      %v779 = vpack.c.bf16 %v764, %v763
      %v780 = vpack.c.bf16 %v766, %v765
      %v781 = vpack.c.bf16 %v768, %v767
      %v782 = vpack.c.bf16 %v770, %v769
      %v783 = vpack.c.bf16 %v772, %v771
      %v784 = vpack.c.bf16 %v774, %v773
      %v785 = vpack.c.bf16 %v776, %v775
      %v786 = vpack.c.bf16 %v778, %v777
      %v787 = vld [vmem:[%s5] sm:$0xf]
      %v788 = vld [vmem:[%s5 + $0x4] sm:$0xf]
      %v789 = vld [vmem:[%s5 + $0x8] sm:$0xf]
      %v790 = vld [vmem:[%s5 + $0xc] sm:$0xf]
      %v791 = vld [vmem:[%s5 + $0x10] sm:$0xf]
      %v792 = vld [vmem:[%s5 + $0x14] sm:$0xf]
      %v793 = vld [vmem:[%s5 + $0x18] sm:$0xf]
      %v794 = vld [vmem:[%s5 + $0x1c] sm:$0xf]
      %v795 = vld [vmem:[%s6] sm:$0x1]
      %v797 = vlaneseq
      %v798 = vshrl.u32 %v797, 7
      %v799 = vsub.s32 0, %v798
      %v800 = vrot.slane %v795, %v799
      %v810 = vunpack.c.l.b16 %v787
      %v811 = vunpack.c.l.b16 %v788
      %v812 = vunpack.c.l.b16 %v789
      %v813 = vunpack.c.l.b16 %v790
      %v814 = vunpack.c.l.b16 %v791
      %v815 = vunpack.c.l.b16 %v792
      %v816 = vunpack.c.l.b16 %v793
      %v817 = vunpack.c.l.b16 %v794
      %v818 = vpack.c.b16 %v811, %v810
      %v819 = vpack.c.b16 %v813, %v812
      %v820 = vpack.c.b16 %v815, %v814
      %v821 = vpack.c.b16 %v817, %v816
      %v827 = vsel %vm425, %v779, 0
      %v830 = vsel %vm425, %v780, 0
      %v833 = vsel %vm425, %v781, 0
      %v836 = vsel %vm425, %v782, 0
      %v839 = vsel %vm425, %v783, 0
      %v842 = vsel %vm425, %v784, 0
      %v845 = vsel %vm425, %v785, 0
      %v848 = vsel %vm425, %v786, 0
      %850 = vmatprep.subr.bf16.mxu0 0
      %851 = vmatpush1.bf16.msra.mxu0 0
      %852 = vmatprep.subr.bf16.mxu0 0
      %853 = vmatpush1.bf16.msra.mxu0 0
      %854 = vmatprep.subr.bf16.mxu0 0
      %855 = vmatpush1.bf16.msra.mxu0 0
      %856 = vmatprep.subr.bf16.mxu0 0
      %857 = vmatpush1.bf16.msra.mxu0 0
      %858 = vmatprep.subr.bf16.mxu0 0
      %859 = vmatpush1.bf16.msra.mxu0 %v821
      %860 = vmatprep.subr.bf16.mxu0 0
      %861 = vmatpush1.bf16.msra.mxu0 %v820
      %862 = vmatprep.subr.bf16.mxu0 0
      %863 = vmatpush1.bf16.msra.mxu0 %v819
      %864 = vmatprep.subr.bf16.mxu0 0
      %865 = vmatpush1.bf16.msra.mxu0 %v818
      %866 = vmatprep.subr.bf16.mxu0 0
      %867 = vmatpush2.bf16.msra.mxu0 0
      %868 = vmatprep.subr.bf16.mxu0 0
      %869 = vmatpush2.bf16.msra.mxu0 0
      %870 = vmatprep.subr.bf16.mxu0 0
      %871 = vmatpush2.bf16.msra.mxu0 0
      %872 = vmatprep.subr.bf16.mxu0 0
      %873 = vmatpush2.bf16.msra.mxu0 0
      %874 = vmatprep.subr.bf16.mxu0 0
      %875 = vmatpush2.bf16.msra.mxu0 0
      %876 = vmatprep.subr.bf16.mxu0 0
      %877 = vmatpush2.bf16.msra.mxu0 0
      %878 = vmatprep.subr.bf16.mxu0 0
      %879 = vmatpush2.bf16.msra.mxu0 0
      %880 = vmatprep.subr.bf16.mxu0 0
      %881 = vmatpush2.bf16.msra.mxu0 0
      %882 = vmatprep.mubr.bf16.mxu0 0
      %883 = vmatmul.mubr.bf16.gmra.mxu0 %v827
      %v884 = vpop.f32.mrf.mxu0
      %v885 = vadd.f32 %v800, %v884
      %v886 = vpop.f32.mrf.mxu0
      %v887 = vpop.f32.mrf.mxu0
      %v888 = vadd.f32 %v800, %v887
      %v889 = vpop.f32.mrf.mxu0
      %890 = vmatprep.mubr.bf16.mxu0 0
      %891 = vmatmul.mubr.bf16.gmra.mxu0 %v830
      %v892 = vpop.f32.mrf.mxu0
      %v893 = vadd.f32 %v800, %v892
      %v894 = vpop.f32.mrf.mxu0
      %v895 = vpop.f32.mrf.mxu0
      %v896 = vadd.f32 %v800, %v895
      %v897 = vpop.f32.mrf.mxu0
      %898 = vmatprep.mubr.bf16.mxu0 0
      %899 = vmatmul.mubr.bf16.gmra.mxu0 %v833
      %v900 = vpop.f32.mrf.mxu0
      %v901 = vadd.f32 %v800, %v900
      %v902 = vpop.f32.mrf.mxu0
      %v903 = vpop.f32.mrf.mxu0
      %v904 = vadd.f32 %v800, %v903
      %v905 = vpop.f32.mrf.mxu0
      %906 = vmatprep.mubr.bf16.mxu0 0
      %907 = vmatmul.mubr.bf16.gmra.mxu0 %v836
      %v908 = vpop.f32.mrf.mxu0
      %v909 = vadd.f32 %v800, %v908
      %v910 = vpop.f32.mrf.mxu0
      %v911 = vpop.f32.mrf.mxu0
      %v912 = vadd.f32 %v800, %v911
      %v913 = vpop.f32.mrf.mxu0
      %914 = vmatprep.mubr.bf16.mxu0 0
      %915 = vmatmul.mubr.bf16.gmra.mxu0 %v839
      %v916 = vpop.f32.mrf.mxu0
      %v917 = vadd.f32 %v800, %v916
      %v918 = vpop.f32.mrf.mxu0
      %v919 = vpop.f32.mrf.mxu0
      %v920 = vadd.f32 %v800, %v919
      %v921 = vpop.f32.mrf.mxu0
      %922 = vmatprep.mubr.bf16.mxu0 0
      %923 = vmatmul.mubr.bf16.gmra.mxu0 %v842
      %v924 = vpop.f32.mrf.mxu0
      %v925 = vadd.f32 %v800, %v924
      %v926 = vpop.f32.mrf.mxu0
      %v927 = vpop.f32.mrf.mxu0
      %v928 = vadd.f32 %v800, %v927
      %v929 = vpop.f32.mrf.mxu0
      %930 = vmatprep.mubr.bf16.mxu0 0
      %931 = vmatmul.mubr.bf16.gmra.mxu0 %v845
      %v932 = vpop.f32.mrf.mxu0
      %v933 = vadd.f32 %v800, %v932
      %v934 = vpop.f32.mrf.mxu0
      %v935 = vpop.f32.mrf.mxu0
      %v936 = vadd.f32 %v800, %v935
      %v937 = vpop.f32.mrf.mxu0
      %938 = vmatprep.mubr.bf16.mxu0 0
      %939 = vmatmul.mubr.bf16.gmra.mxu0 %v848
      %v940 = vpop.f32.mrf.mxu0
      %v941 = vadd.f32 %v800, %v940
      %v942 = vpop.f32.mrf.mxu0
      %v943 = vpop.f32.mrf.mxu0
      %v944 = vadd.f32 %v800, %v943
      %v945 = vpop.f32.mrf.mxu0
      %946 = vdwg.mxu0
      %v947 = vmax.f32 %v885, 0.0
      %v948 = vmax.f32 %v888, 0.0
      %v949 = vmax.f32 %v893, 0.0
      %v950 = vmax.f32 %v896, 0.0
      %v951 = vmax.f32 %v901, 0.0
      %v952 = vmax.f32 %v904, 0.0
      %v953 = vmax.f32 %v909, 0.0
      %v954 = vmax.f32 %v912, 0.0
      %v955 = vmax.f32 %v917, 0.0
      %v956 = vmax.f32 %v920, 0.0
      %v957 = vmax.f32 %v925, 0.0
      %v958 = vmax.f32 %v928, 0.0
      %v959 = vmax.f32 %v933, 0.0
      %v960 = vmax.f32 %v936, 0.0
      %v961 = vmax.f32 %v941, 0.0
      %v962 = vmax.f32 %v944, 0.0
      %v963 = vpack.c.bf16 %v948, %v947
      %v964 = vpack.c.bf16 %v950, %v949
      %v965 = vpack.c.bf16 %v952, %v951
      %v966 = vpack.c.bf16 %v954, %v953
      %v967 = vpack.c.bf16 %v956, %v955
      %v968 = vpack.c.bf16 %v958, %v957
      %v969 = vpack.c.bf16 %v960, %v959
      %v970 = vpack.c.bf16 %v962, %v961
      %v979 = vunpack.c.l.b16 %v963
      %v980 = vunpack.c.h.b16 %v963
      %v981 = vunpack.c.l.b16 %v964
      %v982 = vunpack.c.h.b16 %v964
      %v983 = vunpack.c.l.b16 %v965
      %v984 = vunpack.c.h.b16 %v965
      %v985 = vunpack.c.l.b16 %v966
      %v986 = vunpack.c.h.b16 %v966
      %v987 = vunpack.c.l.b16 %v967
      %v988 = vunpack.c.h.b16 %v967
      %v989 = vunpack.c.l.b16 %v968
      %v990 = vunpack.c.h.b16 %v968
      %v991 = vunpack.c.l.b16 %v969
      %v992 = vunpack.c.h.b16 %v969
      %v993 = vunpack.c.l.b16 %v970
      %v994 = vunpack.c.h.b16 %v970
      %v995 = vpack.c.b16 %v979, %v979
      %v996 = vpack.c.b16 %v980, %v980
      %v997 = vpack.c.b16 %v981, %v981
      %v998 = vpack.c.b16 %v982, %v982
      %v999 = vpack.c.b16 %v983, %v983
      %v1000 = vpack.c.b16 %v984, %v984
      %v1001 = vpack.c.b16 %v985, %v985
      %v1002 = vpack.c.b16 %v986, %v986
      %v1003 = vpack.c.b16 %v987, %v987
      %v1004 = vpack.c.b16 %v988, %v988
      %v1005 = vpack.c.b16 %v989, %v989
      %v1006 = vpack.c.b16 %v990, %v990
      %v1007 = vpack.c.b16 %v991, %v991
      %v1008 = vpack.c.b16 %v992, %v992
      %v1009 = vpack.c.b16 %v993, %v993
      %v1010 = vpack.c.b16 %v994, %v994
      %vm1027 = vcmask 519168
      %1028 = vst.msk [vmem:[%s302] sm:$0xf] %vm1027, %v995
      %1029 = vst.msk [vmem:[%s302 + $0x4] sm:$0xf] %vm1027, %v996
      %1030 = vst.msk [vmem:[%s302 + $0x8] sm:$0xf] %vm1027, %v997
      %1031 = vst.msk [vmem:[%s302 + $0xc] sm:$0xf] %vm1027, %v998
      %1032 = vst.msk [vmem:[%s302 + $0x10] sm:$0xf] %vm1027, %v999
      %1033 = vst.msk [vmem:[%s302 + $0x14] sm:$0xf] %vm1027, %v1000
      %1034 = vst.msk [vmem:[%s302 + $0x18] sm:$0xf] %vm1027, %v1001
      %1035 = vst.msk [vmem:[%s302 + $0x1c] sm:$0xf] %vm1027, %v1002
      %1036 = vst.msk [vmem:[%s302 + $0x20] sm:$0xf] %vm1027, %v1003
      %1037 = vst.msk [vmem:[%s302 + $0x24] sm:$0xf] %vm1027, %v1004
      %1038 = vst.msk [vmem:[%s302 + $0x28] sm:$0xf] %vm1027, %v1005
      %1039 = vst.msk [vmem:[%s302 + $0x2c] sm:$0xf] %vm1027, %v1006
      %1040 = vst.msk [vmem:[%s302 + $0x30] sm:$0xf] %vm1027, %v1007
      %1041 = vst.msk [vmem:[%s302 + $0x34] sm:$0xf] %vm1027, %v1008
      %1042 = vst.msk [vmem:[%s302 + $0x38] sm:$0xf] %vm1027, %v1009
      %1043 = vst.msk [vmem:[%s302 + $0x3c] sm:$0xf] %vm1027, %v1010
      %s1044 = smul.u32 16, %s18
      %p1045 = scmp.lt.s32.totalorder %s1044, 31
      %s1046 = scalar_select %p1045, %s1044, 31
      %s1047 = smul.addr %s1046, 4
      %s1048 = scalar_lea.vmem %s7, %s1047
      // Predicated region
      $region49: #{tpu_custom_call.1} parent=47 // pred_check
        %p1049 = pneg %p193
      $region50: #{tpu_custom_call.1} parent=47 // pred_check_branch
        %1051 = sbr.rel (%p1049) target = $region52
      $region51: #{tpu_custom_call.1} parent=47 // pred_region
        %s1052 = smul.u32 16, %s18
      $region52: #{tpu_custom_call.1} parent=47 // pred_fallthru
        _
    $region48: #{tpu_custom_call.1} parent=5 // pred_fallthru
      _
    %p1053 = scmp.le.s32.totalorder 2, %s13
    // Predicated region
    $region53: #{tpu_custom_call.1} parent=5 // pred_check
      %p1054 = pneg %p1053
    $region54: #{tpu_custom_call.1} parent=5 // pred_check_branch
      %1056 = sbr.rel (%p1054) target = $region56
    $region55: #{tpu_custom_call.1} parent=5 // pred_region
      %s1057 = ssub.s32 %s13, 2
      // Predicated region
      $region57: #{tpu_custom_call.1} parent=55 // pred_check
        %p1058 = pneg %p199
      $region58: #{tpu_custom_call.1} parent=55 // pred_check_branch
        %1060 = sbr.rel (%p1058) target = $region60
      $region59: #{tpu_custom_call.1} parent=55 // pred_region
        %s1061 = smul.u32 16, %s19
        %p1062 = scmp.lt.s32.totalorder %s1061, 31
        %s1063 = scalar_select %p1062, %s1061, 31
        %s1064 = smul.addr %s1063, 4
        %s1065 = scalar_lea.vmem %s7, %s1064
      $region60: #{tpu_custom_call.1} parent=55 // pred_fallthru
        _
    $region56: #{tpu_custom_call.1} parent=5 // pred_fallthru
      _
  $region6: #{tpu_custom_call.1} parent=0 // loop_footer
    %s17 = sadd.s32 1, %s13
  $region7: #{tpu_custom_call.1} parent=0 // loop_footer_branch
    %12 = sbr.rel target = $region3
  $region8: #{tpu_custom_call.1} parent=0 // loop_exit
    _

</llo_original>
